<compile_context>
chip_gen: v5e
topology: v5e:2x2
jax: 0.10.0
libtpu: 0.0.40
codegen_flags: <defaults>
</compile_context>

<pallas_src>
import math
import functools

import jax
import jax.numpy as jnp
from jax import lax
from jax.experimental import pallas as pl
from jax.experimental.pallas import tpu as pltpu


def _divisor_tile(dim, max_tile, align):
    """Largest divisor of `dim` that is <= max_tile and a multiple of `align`.
    Falls back to the full dim so the (8,128) block rule is always satisfied.
    TODO(synk): replace the full-dim fallback with pl.cdiv grids + masked tails
    for prime-ish dims so awkward shapes still get near-optimal tiles."""
    if dim <= max_tile:
        return dim
    t = (max_tile // align) * align
    while t >= align:
        if dim % t == 0:
            return t
        t -= align
    return dim


_VMEM_LIMIT = 48 * 1024 * 1024  # above 16/32 MiB scoped defaults, < v7x 64 MiB


# ---------------------------------------------------------------------------
# Pallas kernel 1: linear layer  y = x @ W.T + b
# ---------------------------------------------------------------------------
def _linear_kernel(x_ref, w_ref, b_ref, o_ref):
    # x_ref: (tm, d_in), w_ref: (tn, d_in), b_ref: (1, tn), o_ref: (tm, tn)
    x = x_ref[...].astype(jnp.bfloat16)
    w = w_ref[...].astype(jnp.bfloat16)
    # x @ W.T via dot_general contracting the shared last dim (no transpose);
    # bf16 operands, f32 accumulation on the MXU.
    y = lax.dot_general(x, w, (((1,), (1,)), ((), ())),
                        preferred_element_type=jnp.float32)
    o_ref[...] = (y + b_ref[...]).astype(o_ref.dtype)


def pallas_linear(x, w, b, out_dtype=jnp.float32):
    """x: (B, S, d_in), w: (d_out, d_in) [PyTorch layout], b: (d_out,)."""
    B, S, d_in = x.shape
    d_out = w.shape[0]
    M = B * S
    x2 = x.reshape(M, d_in)          # free reshape: all batch rows share one grid
    b2 = b.reshape(1, d_out).astype(jnp.float32)

    # Row tile: 8-aligned, capped so the double-buffered x block stays ~4 MiB.
    tm_cap = max(8, min(512, (4 * 1024 * 1024) // max(1, d_in * x.dtype.itemsize)))
    tm = _divisor_tile(M, tm_cap, 8)

    w_bytes = d_out * d_in * w.dtype.itemsize
    if w_bytes <= 8 * 1024 * 1024:
        # Weight (and bias) resident in VMEM: constant index map => single DMA
        # pass over W regardless of how many row tiles stream through.
        grid = (M // tm,)
        in_specs = [
            pl.BlockSpec((tm, d_in), lambda i: (i, 0)),
            pl.BlockSpec((d_out, d_in), lambda i: (0, 0)),
            pl.BlockSpec((1, d_out), lambda i: (0, 0)),
        ]
        out_specs = pl.BlockSpec((tm, d_out), lambda i: (i, 0))
        dims = ("parallel",)
    else:
        # Large weight: tile output features; row axis innermost so each weight
        # tile is fetched once and reused across all row tiles.
        tn = _divisor_tile(d_out, 512, 128)
        grid = (d_out // tn, M // tm)
        in_specs = [
            pl.BlockSpec((tm, d_in), lambda j, i: (i, 0)),
            pl.BlockSpec((tn, d_in), lambda j, i: (j, 0)),
            pl.BlockSpec((1, tn), lambda j, i: (0, j)),
        ]
        out_specs = pl.BlockSpec((tm, tn), lambda j, i: (i, j))
        dims = ("parallel", "parallel")
    # TODO(synk): for very large d_in also tile the contraction axis (K last in
    # grid, "arbitrary") with a VMEM f32 accumulator; not needed at these sizes.

    out = pl.pallas_call(
        _linear_kernel,
        out_shape=jax.ShapeDtypeStruct((M, d_out), out_dtype),
        grid_spec=pltpu.PrefetchScalarGridSpec(
            num_scalar_prefetch=0,
            grid=grid,
            in_specs=in_specs,
            out_specs=out_specs,
        ),
        compiler_params=pltpu.CompilerParams(
            dimension_semantics=dims,
            vmem_limit_bytes=_VMEM_LIMIT),
    )(x2, w, b2)
    return out.reshape(B, S, d_out)


# ---------------------------------------------------------------------------
# Pallas kernel 2: multi-head attention, flash-style online softmax over kv
# tiles.  Inputs stay head-packed (lane-dense): q (1, tq, h*d_k),
# k/v (1, tk, h*d_k | h*d_v), already bf16 (no casts, no scale in the hot loop).
# ---------------------------------------------------------------------------
def _attention_kernel(q_ref, k_ref, v_ref, o_ref,
                      q_sc, m_sc, l_sc, acc_sc, *, h, d_k, d_v):
    kv_i = pl.program_id(2)

    @pl.when(kv_i == 0)
    def _init():
        # Hoist the per-head q slices once per (batch, q-tile): the packed
        # (tq, h*d_k) block is sliced h times here instead of every kv step.
        for hh in range(h):
            q_sc[hh] = q_ref[0, :, hh * d_k:(hh + 1) * d_k]
        m_sc[...] = jnp.full_like(m_sc, -jnp.inf)
        l_sc[...] = jnp.zeros_like(l_sc)
        acc_sc[...] = jnp.zeros_like(acc_sc)

    # Heads are unrolled statically (h is a small compile-time constant).
    # TODO(synk): attention_mask / attention_weights (None in the exercised
    # forward) are not wired into the kernel.
    for hh in range(h):
        k = k_ref[0, :, hh * d_k:(hh + 1) * d_k]            # (tk, d_k) bf16
        v = v_ref[0, :, hh * d_v:(hh + 1) * d_v]            # (tk, d_v) bf16

        # scores = q @ k.T (1/sqrt(d_k) already folded into the q projection).
        s = lax.dot_general(q_sc[hh], k, (((1,), (1,)), ((), ())),
                            preferred_element_type=jnp.float32)   # (tq, tk)

        m_prev = m_sc[hh]                                          # (tq, 1)
        m_new = jnp.maximum(m_prev, jnp.max(s, axis=-1, keepdims=True))
        alpha = jnp.exp(m_prev - m_new)
        p = jnp.exp(s - m_new)                                     # f32
        l_sc[hh] = alpha * l_sc[hh] + jnp.sum(p, axis=-1, keepdims=True)
        acc_sc[hh] = alpha * acc_sc[hh] + lax.dot_general(
            p.astype(jnp.bfloat16), v, (((1,), (0,)), ((), ())),
            preferred_element_type=jnp.float32)                    # (tq, d_v)
        m_sc[hh] = m_new

    @pl.when(kv_i == pl.num_programs(2) - 1)
    def _finalize():
        # Assemble one lane-dense (tq, h*d_v) tile and store it in a single
        # full-width write (no masked per-head partial stores).
        inv_l = pl.reciprocal(l_sc[...], approx=False)             # (h, tq, 1)
        out = acc_sc[...] * inv_l                                  # (h, tq, d_v)
        o_ref[0] = jnp.concatenate(
            [out[hh] for hh in range(h)], axis=-1).astype(o_ref.dtype)


def pallas_attention(q, k, v, *, h):
    """q: (B, nq, h*d_k), k: (B, nk, h*d_k), v: (B, nk, h*d_v) -> (B, nq, h*d_v) bf16."""
    B, nq, hdk = q.shape
    nk = k.shape[1]
    hdv = v.shape[2]
    d_k = hdk // h
    d_v = hdv // h

    # q tile: 8-aligned, up to 512 rows (bounds q block + f32 accumulator).
    tq = _divisor_tile(nq, 512, 8)
    # kv tile: bf16 k/v streams; cap so double-buffered k+v stays a few MiB
    # (fits comfortably under v7x's 64 MiB while amortizing per-step overhead
    # on v5e/v6e).
    tk_cap = max(8, min(1024, (8 * 1024 * 1024) // max(1, (hdk + hdv) * 2 * 2)))
    tk = _divisor_tile(nk, tk_cap, 8)

    kernel = functools.partial(_attention_kernel, h=h, d_k=d_k, d_v=d_v)
    return pl.pallas_call(
        kernel,
        out_shape=jax.ShapeDtypeStruct((B, nq, hdv), jnp.bfloat16),
        grid_spec=pltpu.PrefetchScalarGridSpec(
            num_scalar_prefetch=0,
            grid=(B, nq // tq, nk // tk),
            in_specs=[
                pl.BlockSpec((1, tq, hdk), lambda b, qi, kv: (b, qi, 0)),
                pl.BlockSpec((1, tk, hdk), lambda b, qi, kv: (b, kv, 0)),
                pl.BlockSpec((1, tk, hdv), lambda b, qi, kv: (b, kv, 0)),
            ],
            out_specs=pl.BlockSpec((1, tq, hdv), lambda b, qi, kv: (b, qi, 0)),
            scratch_shapes=[
                pltpu.VMEM((h, tq, d_k), jnp.bfloat16),  # head-split q (set at kv==0)
                pltpu.VMEM((h, tq, 1), jnp.float32),     # running max
                pltpu.VMEM((h, tq, 1), jnp.float32),     # running denom
                pltpu.VMEM((h, tq, d_v), jnp.float32),   # running accumulator
            ],
        ),
        compiler_params=pltpu.CompilerParams(
            dimension_semantics=("parallel", "parallel", "arbitrary"),
            vmem_limit_bytes=_VMEM_LIMIT),
    )(q, k, v)


# ---------------------------------------------------------------------------
# Module wrapper (parameter init in plain JAX)
# ---------------------------------------------------------------------------
def xavier_uniform(key, out_features, in_features):
    bound = math.sqrt(6.0 / (in_features + out_features))
    return jax.random.uniform(
        key, (out_features, in_features), jnp.float32, -bound, bound)


def init_params(key, d_model, d_k, d_v, h):
    kq, kk, kv, ko = jax.random.split(key, 4)
    return {
        "wq": xavier_uniform(kq, h * d_k, d_model), "bq": jnp.zeros((h * d_k,), jnp.float32),
        "wk": xavier_uniform(kk, h * d_k, d_model), "bk": jnp.zeros((h * d_k,), jnp.float32),
        "wv": xavier_uniform(kv, h * d_v, d_model), "bv": jnp.zeros((h * d_v,), jnp.float32),
        "wo": xavier_uniform(ko, d_model, h * d_v), "bo": jnp.zeros((d_model,), jnp.float32),
    }


def scaled_dot_product_attention(params, queries, keys, values, *, d_k, d_v, h,
                                 attention_mask=None, attention_weights=None):
    # TODO(synk): attention_mask / attention_weights are not wired into the
    # attention kernel (they are None in the exercised forward).
    assert attention_mask is None and attention_weights is None
    scale = 1.0 / math.sqrt(d_k)
    # Fold 1/sqrt(d_k) into the (tiny) q projection weights/bias once, so the
    # attention kernel never rescales q inside the kv loop.
    q = pallas_linear(queries, params["wq"] * scale, params["bq"] * scale,
                      out_dtype=jnp.bfloat16)                 # (b_s, nq, h*d_k)
    k = pallas_linear(keys,    params["wk"], params["bk"],
                      out_dtype=jnp.bfloat16)                 # (b_s, nk, h*d_k)
    v = pallas_linear(values,  params["wv"], params["bv"],
                      out_dtype=jnp.bfloat16)                 # (b_s, nk, h*d_v)
    # Heads stay packed along the minor dim -> no reshape/transpose HBM round trips.
    out = pallas_attention(q, k, v, h=h)                      # (b_s, nq, h*d_v) bf16
    out = pallas_linear(out, params["wo"], params["bo"],
                        out_dtype=jnp.float32)                # (b_s, nq, d_model)
    return out


# Pure-JAX f32 reference (mirrors the PyTorch forward exactly) for a sanity check.
def reference(params, queries, keys, values, *, d_k, d_v, h):
    b_s, nq, _ = queries.shape
    nk = keys.shape[1]
    q = (queries @ params["wq"].T + params["bq"]).reshape(b_s, nq, h, d_k).transpose(0, 2, 1, 3)
    k = (keys @ params["wk"].T + params["bk"]).reshape(b_s, nk, h, d_k).transpose(0, 2, 3, 1)
    v = (values @ params["wv"].T + params["bv"]).reshape(b_s, nk, h, d_v).transpose(0, 2, 1, 3)
    att = jnp.matmul(q, k) / math.sqrt(d_k)
    att = jax.nn.softmax(att, axis=-1)
    out = jnp.matmul(att, v).transpose(0, 2, 1, 3).reshape(b_s, nq, h * d_v)
    return out @ params["wo"].T + params["bo"]


if __name__ == "__main__":
    d_model, d_k, d_v, h = 32, 16, 16, 4
    b_s, nq, nk = 2, 8, 8

    key = jax.random.PRNGKey(0)
    kp, kq, kk, kv = jax.random.split(key, 4)
    params = init_params(kp, d_model, d_k, d_v, h)

    queries = jax.random.normal(kq, (b_s, nq, d_model), jnp.float32)
    keys    = jax.random.normal(kk, (b_s, nk, d_model), jnp.float32)
    values  = jax.random.normal(kv, (b_s, nk, d_model), jnp.float32)

    out = scaled_dot_product_attention(params, queries, keys, values,
                                       d_k=d_k, d_v=d_v, h=h)
    out = jax.block_until_ready(out)

    ref = reference(params, queries, keys, values, d_k=d_k, d_v=d_v, h=h)
    assert out.shape == (b_s, nq, d_model)
    err = float(jnp.max(jnp.abs(out - ref)))
    # bf16 projection/attention intermediates with f32 accumulation: small
    # deviation vs. the pure-f32 reference.
    assert err < 1.5e-1, f"mismatch vs pure-JAX reference: {err}"

    print("KERNEL_OK")
</pallas_src>

<mosaic_0001>
module attributes {stable_mosaic.version = 11 : i64} {
  func.func @_linear_kernel(%arg0: i32, %arg1: memref<16x32xf32, #tpu.memory_space<vmem>>, %arg2: memref<64x32xf32, #tpu.memory_space<vmem>>, %arg3: memref<1x64xf32, #tpu.memory_space<vmem>>, %arg4: memref<16x64xbf16, #tpu.memory_space<vmem>>) attributes {dimension_semantics = [#tpu.dimension_semantics<parallel>], iteration_bounds = array<i64: 1>, scalar_prefetch = 0 : i64, scratch_operands = 0 : i64, tpu.core_type = #tpu.core_type<tc>, window_params = [{transform_indices = @transform_0, window_bounds = array<i64: 16, 32>}, {pipeline_mode = #tpu.pipeline_mode<synchronous>, transform_indices = @transform_1, window_bounds = array<i64: 64, 32>}, {pipeline_mode = #tpu.pipeline_mode<synchronous>, transform_indices = @transform_2, window_bounds = array<i64: 1, 64>}, {transform_indices = @transform_3, window_bounds = array<i64: 16, 64>}]} {
    %c0 = arith.constant 0 : index
    %c0_0 = arith.constant 0 : index
    %0 = vector.load %arg1[%c0, %c0_0] : memref<16x32xf32, #tpu.memory_space<vmem>>, vector<16x32xf32>
    %1 = arith.truncf %0 : vector<16x32xf32> to vector<16x32xbf16>
    %c0_1 = arith.constant 0 : index
    %c0_2 = arith.constant 0 : index
    %2 = vector.load %arg2[%c0_1, %c0_2] : memref<64x32xf32, #tpu.memory_space<vmem>>, vector<64x32xf32>
    %3 = arith.truncf %2 : vector<64x32xf32> to vector<64x32xbf16>
    %cst = arith.constant dense<0.000000e+00> : vector<16x64xf32>
    %4 = tpu.matmul %1, %3, %cst {dimension_numbers = #tpu.dot_dimension_numbers<[1], [1], [0], [0], [0, 0, 1, 0], [], []>} : vector<16x32xbf16>, vector<64x32xbf16>, vector<16x64xf32> -> vector<16x64xf32>
    %c0_3 = arith.constant 0 : index
    %c0_4 = arith.constant 0 : index
    %5 = vector.load %arg3[%c0_3, %c0_4] : memref<1x64xf32, #tpu.memory_space<vmem>>, vector<1x64xf32>
    %6 = vector.broadcast %5 : vector<1x64xf32> to vector<16x64xf32>
    %7 = arith.addf %4, %6 : vector<16x64xf32>
    %8 = arith.truncf %7 : vector<16x64xf32> to vector<16x64xbf16>
    %c0_5 = arith.constant 0 : index
    %c0_6 = arith.constant 0 : index
    %9 = vector.load %arg4[%c0_5, %c0_6] : memref<16x64xbf16, #tpu.memory_space<vmem>>, vector<16x64xbf16>
    tpu.vector_store %arg4[%c0_5, %c0_6], %8 {strides = array<i32>} : memref<16x64xbf16, #tpu.memory_space<vmem>>, vector<16x64xbf16>,
    return
  }
  func.func @transform_0(%arg0: i32) -> (i32, i32) {
    %c0_i32 = arith.constant 0 : i32
    %c0_i32_0 = arith.constant 0 : i32
    return %arg0, %c0_i32 : i32, i32
  }
  func.func @transform_1(%arg0: i32) -> (i32, i32) {
    %c0_i32 = arith.constant 0 : i32
    %c0_i32_0 = arith.constant 0 : i32
    %c0_i32_1 = arith.constant 0 : i32
    return %c0_i32, %c0_i32_0 : i32, i32
  }
  func.func @transform_2(%arg0: i32) -> (i32, i32) {
    %c0_i32 = arith.constant 0 : i32
    %c0_i32_0 = arith.constant 0 : i32
    %c0_i32_1 = arith.constant 0 : i32
    return %c0_i32, %c0_i32_0 : i32, i32
  }
  func.func @transform_3(%arg0: i32) -> (i32, i32) {
    %c0_i32 = arith.constant 0 : i32
    %c0_i32_0 = arith.constant 0 : i32
    return %arg0, %c0_i32 : i32, i32
  }
}

</mosaic_0001>

<llo_original>
// kernel: tpu_custom_call.1
$region0: #{tpu_custom_call.1}
  #allocation0 [shape = 'u32[]', space=smem, size = 0x4, offset = 0x4, fixed_abs, tag = 'smem constant byte address 0x4 - core index']
  #allocation1 [shape = 'u32[72,128]{1,0:T(1,128)}', space=vmem, size = 0x9000, scoped, tag = 'internal scratch']
  %s0 = inlined_call_operand.vmem [shape: f32[16,32], index: 0, kind: input, shape index: {}]
  %s1 = inlined_call_operand.vmem [shape: f32[64,32], index: 1, kind: input, shape index: {}]
  %s2 = inlined_call_operand.vmem [shape: f32[1,64], index: 2, kind: input, shape index: {}]
  %s3 = inlined_call_operand.hbm [shape: bf16[16,64], index: 3, kind: output, shape index: {}]
  %s4 = sld [smem:[#allocation0]]
  $region22: #{tpu_custom_call.1} parent=0
    _
  %s6 = ssub.s32 1, %s4
  %s7 = scalar_select 0, %s6, %s4
  $region1: #{tpu_custom_call.1} parent=0
    #allocation2 [shape = 'u8[4096]{0}', space=vmem, size = 0x1000, scoped, tag = 'output window, operand 0, single buffered']
    #allocation3 [shape = 's32[1]{0}', space=sflag, size = 0x4, scoped, tag = 'scoped memory for tpu_custom_call.1']
    %8 = vsyncpa [#allocation3], 0
    // Predicated region
    $region2: #{tpu_custom_call.1} parent=1 // pred_check
      _
    $region3: #{tpu_custom_call.1} parent=1 // pred_check_branch
      %10 = sbr.rel (0) target = $region5
    $region4: #{tpu_custom_call.1} parent=1 // pred_region
      _
    $region5: #{tpu_custom_call.1} parent=1 // pred_fallthru
      _
    // Predicated region
    $region6: #{tpu_custom_call.1} parent=1 // pred_check
      _
    $region7: #{tpu_custom_call.1} parent=1 // pred_check_branch
      %12 = sbr.rel (0) target = $region9
    $region8: #{tpu_custom_call.1} parent=1 // pred_region
      _
    $region9: #{tpu_custom_call.1} parent=1 // pred_fallthru
      _
    // Predicated region
    $region10: #{tpu_custom_call.1} parent=1 // pred_check
      _
    $region11: #{tpu_custom_call.1} parent=1 // pred_check_branch
      %14 = sbr.rel (0) target = $region13
    $region12: #{tpu_custom_call.1} parent=1 // pred_region
      _
    $region13: #{tpu_custom_call.1} parent=1 // pred_fallthru
      _
    %v16 = vld [vmem:[%s0] sm:$0xff]
    %v17 = vld [vmem:[%s0 + $0x8] sm:$0xff]
    %v18 = vpack.c.bf16 %v17, %v16
    %v19 = vld [vmem:[%s1] sm:$0xff]
    %v20 = vld [vmem:[%s1 + $0x8] sm:$0xff]
    %v21 = vld [vmem:[%s1 + $0x10] sm:$0xff]
    %v22 = vld [vmem:[%s1 + $0x18] sm:$0xff]
    %v23 = vld [vmem:[%s1 + $0x20] sm:$0xff]
    %v24 = vld [vmem:[%s1 + $0x28] sm:$0xff]
    %v25 = vld [vmem:[%s1 + $0x30] sm:$0xff]
    %v26 = vld [vmem:[%s1 + $0x38] sm:$0xff]
    %v27 = vpack.c.bf16 %v20, %v19
    %v28 = vpack.c.bf16 %v22, %v21
    %v29 = vpack.c.bf16 %v24, %v23
    %v30 = vpack.c.bf16 %v26, %v25
    %v31 = vld [vmem:[%s2] sm:$0x1]
    %v33 = vperm.slane %v31, 0
    %vm35 = vcmask 261120
    %v37 = vsel %vm35, %v18, 0
    %v40 = vsel %vm35, %v27, 0
    %v43 = vsel %vm35, %v28, 0
    %v46 = vsel %vm35, %v29, 0
    %v49 = vsel %vm35, %v30, 0
    %51 = vmatpush.bf16.xpose.msra.mxu0 0
    %52 = vmatpush.bf16.xpose.msra.mxu0 0
    %53 = vmatpush.bf16.xpose.msra.mxu0 0
    %54 = vmatpush.bf16.xpose.msra.mxu0 0
    %55 = vmatpush.bf16.xpose.msra.mxu0 %v49
    %56 = vmatpush.bf16.xpose.msra.mxu0 %v46
    %57 = vmatpush.bf16.xpose.msra.mxu0 %v43
    %58 = vmatpush.bf16.xpose.msra.mxu0 %v40
    %59 = vmatmul.bf16.gmra.mxu0 %v37
    %v60 = vpop.f32.mrf.mxu0
    %v61 = vadd.f32 %v33, %v60
    %v62 = vpop.f32.mrf.mxu0
    %v63 = vadd.f32 %v33, %v62
    %64 = vdwg.mxu0
    %v65 = vpack.c.bf16 %v61, %v61
    %v66 = vpack.c.bf16 %v63, %v63
    %vm67 = vcmask 519168
    %68 = vst.msk [vmem:[#allocation2] sm:$0xf] %vm67, %v65
    %69 = vst.msk [vmem:[#allocation2 + $0x4] sm:$0xf] %vm67, %v66
    // Predicated region
    $region14: #{tpu_custom_call.1} parent=1 // pred_check
      _
    $region15: #{tpu_custom_call.1} parent=1 // pred_check_branch
      %71 = sbr.rel (0) target = $region17
    $region16: #{tpu_custom_call.1} parent=1 // pred_region
      %73 = vsyncadd [#allocation3], 0
      %s74 = sshll.u32 [#allocation2], 4
      %s75 = int_to_ptr.vmem [resolvable:$true] %s74
      %s76 = sshll.u32 %s3, 4
      %s77 = int_to_ptr.hbm [resolvable:$true] %s76
      %82 = dma.vmem_to_hbm [thread:$0]  %s75, 128, %s77, [#allocation3], 64, 64, 4
    $region17: #{tpu_custom_call.1} parent=1 // pred_fallthru
      _
    // Predicated region
    $region18: #{tpu_custom_call.1} parent=1 // pred_check
      _
    $region19: #{tpu_custom_call.1} parent=1 // pred_check_branch
      %84 = sbr.rel (0) target = $region21
    $region20: #{tpu_custom_call.1} parent=1 // pred_region
      %86 = dma.done [#allocation3], 128
    $region21: #{tpu_custom_call.1} parent=1 // pred_fallthru
      _
    %87 = vsyncpa [#allocation3], 1

</llo_original>
